<compile_context>
chip_gen: v7x
topology: tpu7x:2x2x1
jax: 0.10.0
libtpu: 0.0.40
codegen_flags: <defaults>
</compile_context>

<pallas_src>
import jax
import jax.numpy as jnp
import numpy as np
from jax.experimental import pallas as pl
from jax.experimental.pallas import tpu as pltpu


def _round_up(n, m):
    return ((n + m - 1) // m) * m


def _leaky_relu(x, slope=0.2):
    # max(x, slope*x) == LeakyReLU(slope) for 0 < slope < 1; 2 VPU ops vs 3.
    return jnp.maximum(x, slope * x)


def discriminator_kernel(x_ref, w1_ref, b1_ref, w2_ref, b2_ref, w3_ref, b3_ref, o_ref):
    x = x_ref[...]                                # [IN_PAD, TILE_B] feature-major, lane-dense

    # Layer 1: canonical MXU matmul [128, IN_PAD] @ [IN_PAD, TILE_B] -> [128, TILE_B].
    h1 = jnp.dot(w1_ref[...], x, preferred_element_type=jnp.float32)
    h1 = _leaky_relu(h1 + b1_ref[...])            # b1: [128, 1] lane-broadcast

    # Layer 2: [64, 128] @ [128, TILE_B] -> [64, TILE_B].
    h2 = jnp.dot(w2_ref[...], h1, preferred_element_type=jnp.float32)
    h2 = _leaky_relu(h2 + b2_ref[...])            # b2: [64, 1]

    # Layer 3 (64 -> 1): VPU multiply + sublane reduce -> lane-dense [1, TILE_B] row.
    h3 = jnp.sum(h2 * w3_ref[...], axis=0, keepdims=True) + b3_ref[...]
    o_ref[...] = h3.astype(o_ref.dtype)


def discriminator_forward(x, params, *, tile_b=8192):
    """x: [B, input_dim] float32. params in PyTorch layout:
       w1 [128, in], b1 [128], w2 [64, 128], b2 [64], w3 [1, 64], b3 [1]."""
    B, d = x.shape

    in_pad = max(8, _round_up(d, 8))                       # pad features 5 -> 8
    b_min = _round_up(B, 128)
    # Batch tile: multiple of 128, clamped to the (padded) batch size.
    tile_b = max(128, min(_round_up(tile_b, 128), b_min))
    # Prefer >= 2 grid steps so the "parallel" batch axis can shard across both
    # TensorCores on v7x (no cost on single-TC chips).
    if b_min > 128 and tile_b >= b_min:
        tile_b = _round_up(b_min // 2, 128)
    Bp = _round_up(B, tile_b)

    f32 = jnp.float32
    # Feature-major x: (in_pad, Bp). Padded batch columns produce garbage but
    # are sliced off below; padded feature rows are zero (no effect on matmul).
    x_p = jnp.pad(x.astype(f32), ((0, Bp - B), (0, in_pad - d))).T          # [in_pad, Bp]
    w1 = jnp.pad(params["w1"].astype(f32), ((0, 0), (0, in_pad - d)))       # [128, in_pad]
    b1 = params["b1"].astype(f32).reshape(-1, 1)                            # [128, 1]
    w2 = params["w2"].astype(f32)                                           # [64, 128]
    b2 = params["b2"].astype(f32).reshape(-1, 1)                            # [64, 1]
    w3 = params["w3"].astype(f32).reshape(-1, 1)                            # [64, 1]
    b3 = params["b3"].astype(f32).reshape(1, 1)                             # [1, 1]

    h1_dim = w1.shape[0]
    h2_dim = w2.shape[0]
    grid = (Bp // tile_b,)

    out_t = pl.pallas_call(
        discriminator_kernel,
        out_shape=jax.ShapeDtypeStruct((1, Bp), jnp.float32),
        grid=grid,
        in_specs=[
            pl.BlockSpec((in_pad, tile_b), lambda i: (0, i)),      # x tile (pipelined)
            pl.BlockSpec((h1_dim, in_pad), lambda i: (0, 0)),      # resident weights/biases
            pl.BlockSpec((h1_dim, 1), lambda i: (0, 0)),
            pl.BlockSpec((h2_dim, h1_dim), lambda i: (0, 0)),
            pl.BlockSpec((h2_dim, 1), lambda i: (0, 0)),
            pl.BlockSpec((h2_dim, 1), lambda i: (0, 0)),
            pl.BlockSpec((1, 1), lambda i: (0, 0)),
        ],
        out_specs=pl.BlockSpec((1, tile_b), lambda i: (0, i)),     # lane-dense output row
        compiler_params=pltpu.CompilerParams(
            dimension_semantics=("parallel",),
            # Budget against v7x's 64 MiB physical VMEM; generous on v5e/v6e
            # (and well above v5e's 16 MiB scoped default).
            vmem_limit_bytes=48 * 1024 * 1024,
        ),
    )(x_p, w1, b1, w2, b2, w3, b3)

    # Layout plumbing only: (1, Bp) lane-dense slab -> (B, 1) PyTorch shape.
    return out_t[0, :B].reshape(B, 1)


def init_params(key, input_dim=5):
    """Deterministic init mirroring nn.Linear (PyTorch [out, in] weight layout)."""
    ks = jax.random.split(key, 6)

    def linear(kw, kb, fan_in, fan_out):
        bound = 1.0 / np.sqrt(fan_in)
        w = jax.random.uniform(kw, (fan_out, fan_in), jnp.float32, -bound, bound)
        b = jax.random.uniform(kb, (fan_out,), jnp.float32, -bound, bound)
        return w, b

    w1, b1 = linear(ks[0], ks[1], input_dim, 128)
    w2, b2 = linear(ks[2], ks[3], 128, 64)
    w3, b3 = linear(ks[4], ks[5], 64, 1)
    return {"w1": w1, "b1": b1, "w2": w2, "b2": b2, "w3": w3, "b3": b3}


def reference_forward(x, p):
    h1 = jax.nn.leaky_relu(x @ p["w1"].T + p["b1"], 0.2)
    h2 = jax.nn.leaky_relu(h1 @ p["w2"].T + p["b2"], 0.2)
    return h2 @ p["w3"].T + p["b3"]


if __name__ == "__main__":
    key = jax.random.PRNGKey(0)
    k_params, k_x = jax.random.split(key)

    input_dim = 5
    batch = 300  # small, but exercises the >=2-step grid + batch/feature padding
    params = init_params(k_params, input_dim)
    x = jax.random.normal(k_x, (batch, input_dim), jnp.float32)

    out = discriminator_forward(x, params)   # default tile_b clamps to 256 -> 2 grid steps
    out = jax.block_until_ready(out)

    ref = reference_forward(x, params)
    np.testing.assert_allclose(np.asarray(out), np.asarray(ref), rtol=1e-4, atol=1e-5)
    assert out.shape == (batch, 1)

    print("KERNEL_OK")
</pallas_src>

<mosaic_0001>
module attributes {stable_mosaic.version = 11 : i64} {
  func.func @discriminator_kernel(%arg0: i32, %arg1: memref<8x256xf32, #tpu.memory_space<vmem>>, %arg2: memref<128x8xf32, #tpu.memory_space<vmem>>, %arg3: memref<128x1xf32, #tpu.memory_space<vmem>>, %arg4: memref<64x128xf32, #tpu.memory_space<vmem>>, %arg5: memref<64x1xf32, #tpu.memory_space<vmem>>, %arg6: memref<64x1xf32, #tpu.memory_space<vmem>>, %arg7: memref<1x1xf32, #tpu.memory_space<vmem>>, %arg8: memref<1x256xf32, #tpu.memory_space<vmem>>) attributes {dimension_semantics = [#tpu.dimension_semantics<parallel>], iteration_bounds = array<i64: 2>, scalar_prefetch = 0 : i64, scratch_operands = 0 : i64, tpu.core_type = #tpu.core_type<tc>, window_params = [{transform_indices = @transform_0, window_bounds = array<i64: 8, 256>}, {pipeline_mode = #tpu.pipeline_mode<synchronous>, transform_indices = @transform_1, window_bounds = array<i64: 128, 8>}, {pipeline_mode = #tpu.pipeline_mode<synchronous>, transform_indices = @transform_2, window_bounds = array<i64: 128, 1>}, {pipeline_mode = #tpu.pipeline_mode<synchronous>, transform_indices = @transform_3, window_bounds = array<i64: 64, 128>}, {pipeline_mode = #tpu.pipeline_mode<synchronous>, transform_indices = @transform_4, window_bounds = array<i64: 64, 1>}, {pipeline_mode = #tpu.pipeline_mode<synchronous>, transform_indices = @transform_5, window_bounds = array<i64: 64, 1>}, {pipeline_mode = #tpu.pipeline_mode<synchronous>, transform_indices = @transform_6, window_bounds = array<i64: 1, 1>}, {transform_indices = @transform_7, window_bounds = array<i64: 1, 256>}]} {
    %c0 = arith.constant 0 : index
    %c0_0 = arith.constant 0 : index
    %0 = vector.load %arg1[%c0, %c0_0] : memref<8x256xf32, #tpu.memory_space<vmem>>, vector<8x256xf32>
    %c0_1 = arith.constant 0 : index
    %c0_2 = arith.constant 0 : index
    %1 = vector.load %arg2[%c0_1, %c0_2] : memref<128x8xf32, #tpu.memory_space<vmem>>, vector<128x8xf32>
    %cst = arith.constant dense<0.000000e+00> : vector<128x256xf32>
    %2 = tpu.matmul %1, %0, %cst {dimension_numbers = #tpu.dot_dimension_numbers<[1], [0], [0], [1], [0, 0, 1, 1], [], []>} : vector<128x8xf32>, vector<8x256xf32>, vector<128x256xf32> -> vector<128x256xf32>
    %c0_3 = arith.constant 0 : index
    %c0_4 = arith.constant 0 : index
    %3 = vector.load %arg3[%c0_3, %c0_4] : memref<128x1xf32, #tpu.memory_space<vmem>>, vector<128x1xf32>
    %4 = vector.broadcast %3 : vector<128x1xf32> to vector<128x256xf32>
    %5 = arith.addf %2, %4 : vector<128x256xf32>
    %cst_5 = arith.constant 2.000000e-01 : f32
    %6 = vector.broadcast %cst_5 : f32 to vector<128x256xf32>
    %7 = arith.mulf %6, %5 : vector<128x256xf32>
    %8 = arith.maximumf %5, %7 : vector<128x256xf32>
    %c0_6 = arith.constant 0 : index
    %c0_7 = arith.constant 0 : index
    %9 = vector.load %arg4[%c0_6, %c0_7] : memref<64x128xf32, #tpu.memory_space<vmem>>, vector<64x128xf32>
    %cst_8 = arith.constant dense<0.000000e+00> : vector<64x256xf32>
    %10 = tpu.matmul %9, %8, %cst_8 {dimension_numbers = #tpu.dot_dimension_numbers<[1], [0], [0], [1], [0, 0, 1, 1], [], []>} : vector<64x128xf32>, vector<128x256xf32>, vector<64x256xf32> -> vector<64x256xf32>
    %c0_9 = arith.constant 0 : index
    %c0_10 = arith.constant 0 : index
    %11 = vector.load %arg5[%c0_9, %c0_10] : memref<64x1xf32, #tpu.memory_space<vmem>>, vector<64x1xf32>
    %12 = vector.broadcast %11 : vector<64x1xf32> to vector<64x256xf32>
    %13 = arith.addf %10, %12 : vector<64x256xf32>
    %cst_11 = arith.constant 2.000000e-01 : f32
    %14 = vector.broadcast %cst_11 : f32 to vector<64x256xf32>
    %15 = arith.mulf %14, %13 : vector<64x256xf32>
    %16 = arith.maximumf %13, %15 : vector<64x256xf32>
    %c0_12 = arith.constant 0 : index
    %c0_13 = arith.constant 0 : index
    %17 = vector.load %arg6[%c0_12, %c0_13] : memref<64x1xf32, #tpu.memory_space<vmem>>, vector<64x1xf32>
    %18 = vector.broadcast %17 : vector<64x1xf32> to vector<64x256xf32>
    %19 = arith.mulf %16, %18 : vector<64x256xf32>
    %cst_14 = arith.constant dense<0.000000e+00> : vector<256xf32>
    %20 = vector.multi_reduction <add>, %19, %cst_14 [0] : vector<64x256xf32> to vector<256xf32>
    %21 = vector.shape_cast %20 : vector<256xf32> to vector<1x256xf32>
    %c0_15 = arith.constant 0 : index
    %c0_16 = arith.constant 0 : index
    %22 = vector.load %arg7[%c0_15, %c0_16] : memref<1x1xf32, #tpu.memory_space<vmem>>, vector<1x1xf32>
    %23 = vector.broadcast %22 : vector<1x1xf32> to vector<1x256xf32>
    %24 = arith.addf %21, %23 : vector<1x256xf32>
    %c0_17 = arith.constant 0 : index
    %c0_18 = arith.constant 0 : index
    %25 = vector.load %arg8[%c0_17, %c0_18] : memref<1x256xf32, #tpu.memory_space<vmem>>, vector<1x256xf32>
    tpu.vector_store %arg8[%c0_17, %c0_18], %24 {strides = array<i32>} : memref<1x256xf32, #tpu.memory_space<vmem>>, vector<1x256xf32>,
    return
  }
  func.func @transform_0(%arg0: i32) -> (i32, i32) {
    %c0_i32 = arith.constant 0 : i32
    %c0_i32_0 = arith.constant 0 : i32
    return %c0_i32, %arg0 : i32, i32
  }
  func.func @transform_1(%arg0: i32) -> (i32, i32) {
    %c0_i32 = arith.constant 0 : i32
    %c0_i32_0 = arith.constant 0 : i32
    %c0_i32_1 = arith.constant 0 : i32
    return %c0_i32, %c0_i32_0 : i32, i32
  }
  func.func @transform_2(%arg0: i32) -> (i32, i32) {
    %c0_i32 = arith.constant 0 : i32
    %c0_i32_0 = arith.constant 0 : i32
    %c0_i32_1 = arith.constant 0 : i32
    return %c0_i32, %c0_i32_0 : i32, i32
  }
  func.func @transform_3(%arg0: i32) -> (i32, i32) {
    %c0_i32 = arith.constant 0 : i32
    %c0_i32_0 = arith.constant 0 : i32
    %c0_i32_1 = arith.constant 0 : i32
    return %c0_i32, %c0_i32_0 : i32, i32
  }
  func.func @transform_4(%arg0: i32) -> (i32, i32) {
    %c0_i32 = arith.constant 0 : i32
    %c0_i32_0 = arith.constant 0 : i32
    %c0_i32_1 = arith.constant 0 : i32
    return %c0_i32, %c0_i32_0 : i32, i32
  }
  func.func @transform_5(%arg0: i32) -> (i32, i32) {
    %c0_i32 = arith.constant 0 : i32
    %c0_i32_0 = arith.constant 0 : i32
    %c0_i32_1 = arith.constant 0 : i32
    return %c0_i32, %c0_i32_0 : i32, i32
  }
  func.func @transform_6(%arg0: i32) -> (i32, i32) {
    %c0_i32 = arith.constant 0 : i32
    %c0_i32_0 = arith.constant 0 : i32
    %c0_i32_1 = arith.constant 0 : i32
    return %c0_i32, %c0_i32_0 : i32, i32
  }
  func.func @transform_7(%arg0: i32) -> (i32, i32) {
    %c0_i32 = arith.constant 0 : i32
    %c0_i32_0 = arith.constant 0 : i32
    return %c0_i32, %arg0 : i32, i32
  }
}

</mosaic_0001>

<llo_original>
// kernel: tpu_custom_call.1
$region0: #{tpu_custom_call.1}
  #allocation0 [shape = 'u32[]', space=smem, size = 0x4, offset = 0x4, fixed_abs, tag = 'smem constant byte address 0x4 - core index']
  #allocation1 [shape = 'u32[144,128]{1,0:T(1,128)}', space=vmem, size = 0x12000, scoped, tag = 'internal scratch']
  #allocation2 [shape = 'f32[1,1]{1,0:T(1,128)S(1)}', space=vmem, size = 0x200, scoped, tag = 'scoped memory for tpu_custom_call.1']
  %s0 = inlined_call_operand.vmem [shape: f32[8,512], index: 0, kind: input, shape index: {}]
  %s1 = inlined_call_operand.vmem [shape: f32[128,8], index: 1, kind: input, shape index: {}]
  %s2 = inlined_call_operand.vmem [shape: f32[128,1], index: 2, kind: input, shape index: {}]
  %s3 = inlined_call_operand.vmem [shape: f32[64,128], index: 3, kind: input, shape index: {}]
  %s4 = inlined_call_operand.vmem [shape: f32[64,1], index: 4, kind: input, shape index: {}]
  %s5 = inlined_call_operand.vmem [shape: f32[64,1], index: 5, kind: input, shape index: {}]
  %s6 = inlined_call_operand.<no memory space> [shape: f32[1,1], index: 6, kind: input, shape index: {}]
  %s7 = inlined_call_operand.hbm [shape: f32[1,512], index: 7, kind: output, shape index: {}]
  %s8 = sld [smem:[#allocation0]]
  $region61: #{tpu_custom_call.1} parent=0
    _
  %s10 = ssub.s32 1, %s8
  %s11 = scalar_select 0, %s10, %s8
  %v12 = vstv %s6
  %13 = vst [vmem:[#allocation2] sm:$0x1] %v12
  $region1: #{tpu_custom_call.1} parent=0
    #allocation3 [shape = 'u8[2048]{0}', space=vmem, size = 0x800, scoped, tag = 'output window, operand 0']
    #allocation4 [shape = 's32[2]{0}', space=sflag, size = 0x8, scoped, tag = 'scoped memory for tpu_custom_call.1']
    %14 = vsyncpa [#allocation4], 0
    %s15 = scalar_lea.sflag [#allocation4], 1
    %16 = vsyncpa %s15, 0
    loop: start=0, step=1, limit=4
    $region2: #{tpu_custom_call.1} parent=1 // loop_pre_header
      _
    $region3: #{tpu_custom_call.1} parent=1 // loop_header
      %s18 = sphi 0, %s22
      %p19 = scmp.ge.s32.totalorder %s18, 4
      %s28 = sphi 0, %s30
      %s31 = sphi 0, %s28
      %s32 = sphi 0, %s31
      %s48 = sphi 0, %s32
      %s52 = sphi 0, %s52
      %s54 = sphi 0, %s52
      %s55 = sphi 0, %s54
      %s69 = sphi 0, %s55
      %s73 = sphi 0, %s73
      %s75 = sphi 0, %s73
      %s76 = sphi 0, %s75
      %s90 = sphi 0, %s76
      %s94 = sphi 0, %s94
      %s96 = sphi 0, %s94
      %s97 = sphi 0, %s96
      %s111 = sphi 0, %s97
      %s115 = sphi 0, %s115
      %s117 = sphi 0, %s115
      %s118 = sphi 0, %s117
      %s132 = sphi 0, %s118
      %s136 = sphi 0, %s136
      %s138 = sphi 0, %s136
      %s139 = sphi 0, %s138
      %s153 = sphi 0, %s139
      %s157 = sphi 0, %s157
      %s159 = sphi 0, %s157
      %s160 = sphi 0, %s159
      %s174 = sphi 0, %s160
      %s180 = sphi 0, %s182
      %s183 = sphi 0, %s180
      %s184 = sphi 0, %s183
      %s200 = sphi 0, %s184
    $region4: #{tpu_custom_call.1} parent=1 // loop_header_branch
      %21 = sbr.rel (%p19) target = $region8
    $region5: #{tpu_custom_call.1} parent=1 // loop_body
      %s23 = ssub.s32 %s18, 1
      %s24 = ssub.s32 %s18, 2
      %s25 = sadd.s32 %s18, 1
      %s26 = ssub.s32 %s18, %s25
      %p27 = scmp.eq.s32.totalorder %s26, 0
      %s29 = sadd.s32 %s28, 1
      %s30 = scalar_select %p27, %s28, %s29
      %p33 = pneg %p27
      %p34 = scmp.eq.s32.totalorder %s18, 1
      %p35 = por %p33, %p34
      %p36 = scmp.ne.s32.totalorder %s28, %s31
      %p37 = scmp.eq.s32.totalorder %s18, 0
      %p38 = por %p36, %p37
      %p39 = scmp.ne.s32.totalorder %s28, %s31
      %p40 = scmp.eq.s32.totalorder %s23, 1
      %p41 = por %p39, %p40
      %p42 = scmp.ne.s32.totalorder %s31, %s32
      %p43 = scmp.eq.s32.totalorder %s23, 0
      %p44 = por %p42, %p43
      %p45 = scmp.ne.s32.totalorder %s31, %s32
      %p46 = scmp.eq.s32.totalorder %s24, 1
      %p47 = por %p45, %p46
      %p49 = scmp.ne.s32.totalorder %s32, %s48
      %p50 = scmp.eq.s32.totalorder %s24, 0
      %p51 = por %p49, %p50
      %s53 = sadd.s32 %s52, 1
      %p56 = scmp.eq.s32.totalorder %s18, 1
      %p57 = scmp.ne.s32.totalorder %s52, %s54
      %p58 = scmp.eq.s32.totalorder %s18, 0
      %p59 = por %p57, %p58
      %p60 = scmp.ne.s32.totalorder %s52, %s54
      %p61 = scmp.eq.s32.totalorder %s23, 1
      %p62 = por %p60, %p61
      %p63 = scmp.ne.s32.totalorder %s54, %s55
      %p64 = scmp.eq.s32.totalorder %s23, 0
      %p65 = por %p63, %p64
      %p66 = scmp.ne.s32.totalorder %s54, %s55
      %p67 = scmp.eq.s32.totalorder %s24, 1
      %p68 = por %p66, %p67
      %p70 = scmp.ne.s32.totalorder %s55, %s69
      %p71 = scmp.eq.s32.totalorder %s24, 0
      %p72 = por %p70, %p71
      %s74 = sadd.s32 %s73, 1
      %p77 = scmp.eq.s32.totalorder %s18, 1
      %p78 = scmp.ne.s32.totalorder %s73, %s75
      %p79 = scmp.eq.s32.totalorder %s18, 0
      %p80 = por %p78, %p79
      %p81 = scmp.ne.s32.totalorder %s73, %s75
      %p82 = scmp.eq.s32.totalorder %s23, 1
      %p83 = por %p81, %p82
      %p84 = scmp.ne.s32.totalorder %s75, %s76
      %p85 = scmp.eq.s32.totalorder %s23, 0
      %p86 = por %p84, %p85
      %p87 = scmp.ne.s32.totalorder %s75, %s76
      %p88 = scmp.eq.s32.totalorder %s24, 1
      %p89 = por %p87, %p88
      %p91 = scmp.ne.s32.totalorder %s76, %s90
      %p92 = scmp.eq.s32.totalorder %s24, 0
      %p93 = por %p91, %p92
      %s95 = sadd.s32 %s94, 1
      %p98 = scmp.eq.s32.totalorder %s18, 1
      %p99 = scmp.ne.s32.totalorder %s94, %s96
      %p100 = scmp.eq.s32.totalorder %s18, 0
      %p101 = por %p99, %p100
      %p102 = scmp.ne.s32.totalorder %s94, %s96
      %p103 = scmp.eq.s32.totalorder %s23, 1
      %p104 = por %p102, %p103
      %p105 = scmp.ne.s32.totalorder %s96, %s97
      %p106 = scmp.eq.s32.totalorder %s23, 0
      %p107 = por %p105, %p106
      %p108 = scmp.ne.s32.totalorder %s96, %s97
      %p109 = scmp.eq.s32.totalorder %s24, 1
      %p110 = por %p108, %p109
      %p112 = scmp.ne.s32.totalorder %s97, %s111
      %p113 = scmp.eq.s32.totalorder %s24, 0
      %p114 = por %p112, %p113
      %s116 = sadd.s32 %s115, 1
      %p119 = scmp.eq.s32.totalorder %s18, 1
      %p120 = scmp.ne.s32.totalorder %s115, %s117
      %p121 = scmp.eq.s32.totalorder %s18, 0
      %p122 = por %p120, %p121
      %p123 = scmp.ne.s32.totalorder %s115, %s117
      %p124 = scmp.eq.s32.totalorder %s23, 1
      %p125 = por %p123, %p124
      %p126 = scmp.ne.s32.totalorder %s117, %s118
      %p127 = scmp.eq.s32.totalorder %s23, 0
      %p128 = por %p126, %p127
      %p129 = scmp.ne.s32.totalorder %s117, %s118
      %p130 = scmp.eq.s32.totalorder %s24, 1
      %p131 = por %p129, %p130
      %p133 = scmp.ne.s32.totalorder %s118, %s132
      %p134 = scmp.eq.s32.totalorder %s24, 0
      %p135 = por %p133, %p134
      %s137 = sadd.s32 %s136, 1
      %p140 = scmp.eq.s32.totalorder %s18, 1
      %p141 = scmp.ne.s32.totalorder %s136, %s138
      %p142 = scmp.eq.s32.totalorder %s18, 0
      %p143 = por %p141, %p142
      %p144 = scmp.ne.s32.totalorder %s136, %s138
      %p145 = scmp.eq.s32.totalorder %s23, 1
      %p146 = por %p144, %p145
      %p147 = scmp.ne.s32.totalorder %s138, %s139
      %p148 = scmp.eq.s32.totalorder %s23, 0
      %p149 = por %p147, %p148
      %p150 = scmp.ne.s32.totalorder %s138, %s139
      %p151 = scmp.eq.s32.totalorder %s24, 1
      %p152 = por %p150, %p151
      %p154 = scmp.ne.s32.totalorder %s139, %s153
      %p155 = scmp.eq.s32.totalorder %s24, 0
      %p156 = por %p154, %p155
      %s158 = sadd.s32 %s157, 1
      %p161 = scmp.eq.s32.totalorder %s18, 1
      %p162 = scmp.ne.s32.totalorder %s157, %s159
      %p163 = scmp.eq.s32.totalorder %s18, 0
      %p164 = por %p162, %p163
      %p165 = scmp.ne.s32.totalorder %s157, %s159
      %p166 = scmp.eq.s32.totalorder %s23, 1
      %p167 = por %p165, %p166
      %p168 = scmp.ne.s32.totalorder %s159, %s160
      %p169 = scmp.eq.s32.totalorder %s23, 0
      %p170 = por %p168, %p169
      %p171 = scmp.ne.s32.totalorder %s159, %s160
      %p172 = scmp.eq.s32.totalorder %s24, 1
      %p173 = por %p171, %p172
      %p175 = scmp.ne.s32.totalorder %s160, %s174
      %p176 = scmp.eq.s32.totalorder %s24, 0
      %p177 = por %p175, %p176
      %s178 = ssub.s32 %s18, %s25
      %p179 = scmp.eq.s32.totalorder %s178, 0
      %s181 = sadd.s32 %s180, 1
      %s182 = scalar_select %p179, %s180, %s181
      %p185 = pneg %p179
      %p186 = scmp.eq.s32.totalorder %s18, 1
      %p187 = por %p185, %p186
      %p188 = scmp.ne.s32.totalorder %s180, %s183
      %p189 = scmp.eq.s32.totalorder %s18, 0
      %p190 = por %p188, %p189
      %p191 = scmp.ne.s32.totalorder %s180, %s183
      %p192 = scmp.eq.s32.totalorder %s23, 1
      %p193 = por %p191, %p192
      %p194 = scmp.ne.s32.totalorder %s183, %s184
      %p195 = scmp.eq.s32.totalorder %s23, 0
      %p196 = por %p194, %p195
      %p197 = scmp.ne.s32.totalorder %s183, %s184
      %p198 = scmp.eq.s32.totalorder %s24, 1
      %p199 = por %p197, %p198
      %p201 = scmp.ne.s32.totalorder %s184, %s200
      %p202 = scmp.eq.s32.totalorder %s24, 0
      %p203 = por %p201, %p202
      %p204 = scmp.le.s32.totalorder 1, %s18
      %p205 = scmp.lt.s32.totalorder %s18, 3
      %p206 = pnand %p204, %p205
      %p207 = pneg %p206
      // Predicated region
      $region9: #{tpu_custom_call.1} parent=5 // pred_check
        _
      $region10: #{tpu_custom_call.1} parent=5 // pred_check_branch
        %209 = sbr.rel (%p206) target = $region12
      $region11: #{tpu_custom_call.1} parent=5 // pred_region
        %s210 = ssub.s32 %s18, 1
        // Predicated region
        $region13: #{tpu_custom_call.1} parent=11 // pred_check
          %p211 = pneg %p65
        $region14: #{tpu_custom_call.1} parent=11 // pred_check_branch
          %213 = sbr.rel (%p211) target = $region16
        $region15: #{tpu_custom_call.1} parent=11 // pred_region
          _
        $region16: #{tpu_custom_call.1} parent=11 // pred_fallthru
          _
        // Predicated region
        $region17: #{tpu_custom_call.1} parent=11 // pred_check
          %p214 = pneg %p86
        $region18: #{tpu_custom_call.1} parent=11 // pred_check_branch
          %216 = sbr.rel (%p214) target = $region20
        $region19: #{tpu_custom_call.1} parent=11 // pred_region
          _
        $region20: #{tpu_custom_call.1} parent=11 // pred_fallthru
          _
        // Predicated region
        $region21: #{tpu_custom_call.1} parent=11 // pred_check
          %p217 = pneg %p107
        $region22: #{tpu_custom_call.1} parent=11 // pred_check_branch
          %219 = sbr.rel (%p217) target = $region24
        $region23: #{tpu_custom_call.1} parent=11 // pred_region
          _
        $region24: #{tpu_custom_call.1} parent=11 // pred_fallthru
          _
        // Predicated region
        $region25: #{tpu_custom_call.1} parent=11 // pred_check
          %p220 = pneg %p128
        $region26: #{tpu_custom_call.1} parent=11 // pred_check_branch
          %222 = sbr.rel (%p220) target = $region28
        $region27: #{tpu_custom_call.1} parent=11 // pred_region
          _
        $region28: #{tpu_custom_call.1} parent=11 // pred_fallthru
          _
        // Predicated region
        $region29: #{tpu_custom_call.1} parent=11 // pred_check
          %p223 = pneg %p149
        $region30: #{tpu_custom_call.1} parent=11 // pred_check_branch
          %225 = sbr.rel (%p223) target = $region32
        $region31: #{tpu_custom_call.1} parent=11 // pred_region
          _
        $region32: #{tpu_custom_call.1} parent=11 // pred_fallthru
          _
        // Predicated region
        $region33: #{tpu_custom_call.1} parent=11 // pred_check
          %p226 = pneg %p170
        $region34: #{tpu_custom_call.1} parent=11 // pred_check_branch
          %228 = sbr.rel (%p226) target = $region36
        $region35: #{tpu_custom_call.1} parent=11 // pred_region
          _
        $region36: #{tpu_custom_call.1} parent=11 // pred_fallthru
          _
      $region12: #{tpu_custom_call.1} parent=5 // pred_fallthru
        _
      %p229 = scmp.lt.s32.totalorder %s18, 2
      // Predicated region
      $region37: #{tpu_custom_call.1} parent=5 // pred_check
        %p230 = pneg %p229
      $region38: #{tpu_custom_call.1} parent=5 // pred_check_branch
        %232 = sbr.rel (%p230) target = $region40
      $region39: #{tpu_custom_call.1} parent=5 // pred_region
        // Predicated region
        $region41: #{tpu_custom_call.1} parent=39 // pred_check
          %p233 = pneg %p38
        $region42: #{tpu_custom_call.1} parent=39 // pred_check_branch
          %235 = sbr.rel (%p233) target = $region44
        $region43: #{tpu_custom_call.1} parent=39 // pred_region
          %s236 = smul.u32 2, %s18
          %p237 = scmp.lt.s32.totalorder %s236, 3
          %s238 = scalar_select %p237, %s236, 3
          %s239 = smul.addr %s238, 8
          %s240 = scalar_lea.vmem %s0, %s239
          %s241 = smul.u32 2, %s18
        $region44: #{tpu_custom_call.1} parent=39 // pred_fallthru
          _
      $region40: #{tpu_custom_call.1} parent=5 // pred_fallthru
        _
      %p242 = scmp.le.s32.totalorder 1, %s18
      %p243 = scmp.lt.s32.totalorder %s18, 3
      %p244 = pnand %p242, %p243
      %p245 = pneg %p244
      // Predicated region
      $region45: #{tpu_custom_call.1} parent=5 // pred_check
        _
      $region46: #{tpu_custom_call.1} parent=5 // pred_check_branch
        %247 = sbr.rel (%p244) target = $region48
      $region47: #{tpu_custom_call.1} parent=5 // pred_region
        %s248 = ssub.s32 %s18, 1
        %s249 = smul.u32 2, %s23
        %p250 = scmp.lt.s32.totalorder %s249, 3
        %s251 = scalar_select %p250, %s249, 3
        %s252 = smul.addr %s251, 8
        %s253 = scalar_lea.vmem %s0, %s252
        %p254 = pneg %p44
        %p255 = pneg %p41
        %p256 = pneg %p65
        %p257 = pneg %p62
        %p258 = pneg %p86
        %p259 = pneg %p83
        %p260 = pneg %p107
        %p261 = pneg %p104
        %p262 = pneg %p128
        %p263 = pneg %p125
        %p264 = pneg %p149
        %p265 = pneg %p146
        %p266 = pneg %p170
        %p267 = pneg %p167
        %p268 = pneg %p196
        %p269 = pneg %p193
        %s270 = sand.u32 %s183, 1
        %s271 = scalar_lea.sflag [#allocation4], %s270
        %s272 = sand.u32 %s183, 1
        %s273 = smul.addr %s272, 2
        %s274 = scalar_lea.vmem [#allocation3], %s273
        %s275 = smul.u32 2, %s23
        %p276 = scmp.lt.s32.totalorder %s275, 3
        %s277 = scalar_select %p276, %s275, 3
        %s278 = smul.addr %s277, 8
        %s279 = scalar_lea.vmem %s0, %s278
        %s280 = smul.u32 2, %s23
        %s281 = smul.u32 2, %s23
        %v282 = vld [vmem:[%s279] sm:$0xff]
        %v283 = vld [vmem:[%s279 + $0x8] sm:$0xff]
        %v284 = vld [vmem:[%s1] sm:$0xff]
        %v285 = vld [vmem:[%s1 + $0x8] sm:$0xff]
        %v286 = vld [vmem:[%s1 + $0x10] sm:$0xff]
        %v287 = vld [vmem:[%s1 + $0x18] sm:$0xff]
        %v288 = vld [vmem:[%s1 + $0x20] sm:$0xff]
        %v289 = vld [vmem:[%s1 + $0x28] sm:$0xff]
        %v290 = vld [vmem:[%s1 + $0x30] sm:$0xff]
        %v291 = vld [vmem:[%s1 + $0x38] sm:$0xff]
        %v292 = vld [vmem:[%s1 + $0x40] sm:$0xff]
        %v293 = vld [vmem:[%s1 + $0x48] sm:$0xff]
        %v294 = vld [vmem:[%s1 + $0x50] sm:$0xff]
        %v295 = vld [vmem:[%s1 + $0x58] sm:$0xff]
        %v296 = vld [vmem:[%s1 + $0x60] sm:$0xff]
        %v297 = vld [vmem:[%s1 + $0x68] sm:$0xff]
        %v298 = vld [vmem:[%s1 + $0x70] sm:$0xff]
        %v299 = vld [vmem:[%s1 + $0x78] sm:$0xff]
        %v300 = vld [vmem:[%s2] sm:$0xff]
        %v301 = vld [vmem:[%s2 + $0x8] sm:$0xff]
        %v302 = vld [vmem:[%s2 + $0x10] sm:$0xff]
        %v303 = vld [vmem:[%s2 + $0x18] sm:$0xff]
        %v304 = vld [vmem:[%s2 + $0x20] sm:$0xff]
        %v305 = vld [vmem:[%s2 + $0x28] sm:$0xff]
        %v306 = vld [vmem:[%s2 + $0x30] sm:$0xff]
        %v307 = vld [vmem:[%s2 + $0x38] sm:$0xff]
        %v308 = vld [vmem:[%s2 + $0x40] sm:$0xff]
        %v309 = vld [vmem:[%s2 + $0x48] sm:$0xff]
        %v310 = vld [vmem:[%s2 + $0x50] sm:$0xff]
        %v311 = vld [vmem:[%s2 + $0x58] sm:$0xff]
        %v312 = vld [vmem:[%s2 + $0x60] sm:$0xff]
        %v313 = vld [vmem:[%s2 + $0x68] sm:$0xff]
        %v314 = vld [vmem:[%s2 + $0x70] sm:$0xff]
        %v315 = vld [vmem:[%s2 + $0x78] sm:$0xff]
        %317 = vset.pattern.permute.xlu0 0
        %318 = vperm.xlu0 %317, %v300
        %v319 = vpop.permute.xlu0 %318
        %322 = vset.pattern.permute.xlu0 0
        %323 = vperm.xlu0 %322, %v301
        %v324 = vpop.permute.xlu0 %323
        %327 = vset.pattern.permute.xlu0 0
        %328 = vperm.xlu0 %327, %v302
        %v329 = vpop.permute.xlu0 %328
        %332 = vset.pattern.permute.xlu0 0
        %333 = vperm.xlu0 %332, %v303
        %v334 = vpop.permute.xlu0 %333
        %337 = vset.pattern.permute.xlu0 0
        %338 = vperm.xlu0 %337, %v304
        %v339 = vpop.permute.xlu0 %338
        %342 = vset.pattern.permute.xlu0 0
        %343 = vperm.xlu0 %342, %v305
        %v344 = vpop.permute.xlu0 %343
        %347 = vset.pattern.permute.xlu0 0
        %348 = vperm.xlu0 %347, %v306
        %v349 = vpop.permute.xlu0 %348
        %352 = vset.pattern.permute.xlu0 0
        %353 = vperm.xlu0 %352, %v307
        %v354 = vpop.permute.xlu0 %353
        %357 = vset.pattern.permute.xlu0 0
        %358 = vperm.xlu0 %357, %v308
        %v359 = vpop.permute.xlu0 %358
        %362 = vset.pattern.permute.xlu0 0
        %363 = vperm.xlu0 %362, %v309
        %v364 = vpop.permute.xlu0 %363
        %367 = vset.pattern.permute.xlu0 0
        %368 = vperm.xlu0 %367, %v310
        %v369 = vpop.permute.xlu0 %368
        %372 = vset.pattern.permute.xlu0 0
        %373 = vperm.xlu0 %372, %v311
        %v374 = vpop.permute.xlu0 %373
        %377 = vset.pattern.permute.xlu0 0
        %378 = vperm.xlu0 %377, %v312
        %v379 = vpop.permute.xlu0 %378
        %382 = vset.pattern.permute.xlu0 0
        %383 = vperm.xlu0 %382, %v313
        %v384 = vpop.permute.xlu0 %383
        %387 = vset.pattern.permute.xlu0 0
        %388 = vperm.xlu0 %387, %v314
        %v389 = vpop.permute.xlu0 %388
        %392 = vset.pattern.permute.xlu0 0
        %393 = vperm.xlu0 %392, %v315
        %v394 = vpop.permute.xlu0 %393
        %vm396 = vcmask 64512
        %v398 = vsel %vm396, %v284, 0
        %v401 = vsel %vm396, %v285, 0
        %v404 = vsel %vm396, %v286, 0
        %v407 = vsel %vm396, %v287, 0
        %v410 = vsel %vm396, %v288, 0
        %v413 = vsel %vm396, %v289, 0
        %v416 = vsel %vm396, %v290, 0
        %v419 = vsel %vm396, %v291, 0
        %v422 = vsel %vm396, %v292, 0
        %v425 = vsel %vm396, %v293, 0
        %v428 = vsel %vm396, %v294, 0
        %v431 = vsel %vm396, %v295, 0
        %v434 = vsel %vm396, %v296, 0
        %v437 = vsel %vm396, %v297, 0
        %v440 = vsel %vm396, %v298, 0
        %v443 = vsel %vm396, %v299, 0
        %445 = vmatprep.subr.mxu0 %v283
        %446 = vmatpush1.msra.mxu0 %v282
        %447 = vmatprep.subr.mxu0 0.0
        %448 = vmatpush1.msra.mxu0 0.0
        %449 = vmatprep.subr.mxu0 0.0
        %450 = vmatpush1.msra.mxu0 0.0
        %451 = vmatprep.subr.mxu0 0.0
        %452 = vmatpush1.msra.mxu0 0.0
        %453 = vmatprep.subr.mxu0 0.0
        %454 = vmatpush1.msra.mxu0 0.0
        %455 = vmatprep.subr.mxu0 0.0
        %456 = vmatpush1.msra.mxu0 0.0
        %457 = vmatprep.subr.mxu0 0.0
        %458 = vmatpush1.msra.mxu0 0.0
        %459 = vmatprep.subr.mxu0 0.0
        %460 = vmatpush1.msra.mxu0 0.0
        %461 = vmatprep.subr.mxu0 0.0
        %462 = vmatpush1.msra.mxu0 0.0
        %463 = vmatprep.subr.mxu0 0.0
        %464 = vmatpush1.msra.mxu0 0.0
        %465 = vmatprep.subr.mxu0 0.0
        %466 = vmatpush1.msra.mxu0 0.0
        %467 = vmatprep.subr.mxu0 0.0
        %468 = vmatpush1.msra.mxu0 0.0
        %469 = vmatprep.subr.mxu0 0.0
        %470 = vmatpush1.msra.mxu0 0.0
        %471 = vmatprep.subr.mxu0 0.0
        %472 = vmatpush1.msra.mxu0 0.0
        %473 = vmatprep.subr.mxu0 0.0
        %474 = vmatpush1.msra.mxu0 0.0
        %475 = vmatprep.subr.mxu0 0.0
        %476 = vmatpush1.msra.mxu0 0.0
        %477 = vmatprep.subr.mxu0 0.0
        %478 = vmatpush1.msra.mxu0 0.0
        %479 = vmatprep.subr.mxu0 0.0
        %480 = vmatpush1.msra.mxu0 0.0
        %481 = vmatprep.subr.mxu0 0.0
        %482 = vmatpush1.msra.mxu0 0.0
        %483 = vmatprep.subr.mxu0 0.0
        %484 = vmatpush1.msra.mxu0 0.0
        %485 = vmatprep.subr.mxu0 0.0
        %486 = vmatpush1.msra.mxu0 0.0
        %487 = vmatprep.subr.mxu0 0.0
        %488 = vmatpush1.msra.mxu0 0.0
        %489 = vmatprep.subr.mxu0 0.0
        %490 = vmatpush1.msra.mxu0 0.0
        %491 = vmatprep.subr.mxu0 0.0
        %492 = vmatpush1.msra.mxu0 0.0
        %493 = vmatprep.subr.mxu0 0.0
        %494 = vmatpush1.msra.mxu0 0.0
        %495 = vmatprep.subr.mxu0 0.0
        %496 = vmatpush1.msra.mxu0 0.0
        %497 = vmatprep.subr.mxu0 0.0
        %498 = vmatpush1.msra.mxu0 0.0
        %499 = vmatprep.subr.mxu0 0.0
        %500 = vmatpush1.msra.mxu0 0.0
        %501 = vmatprep.subr.mxu0 0.0
        %502 = vmatpush1.msra.mxu0 0.0
        %503 = vmatprep.subr.mxu0 0.0
        %504 = vmatpush1.msra.mxu0 0.0
        %505 = vmatprep.subr.mxu0 0.0
        %506 = vmatpush1.msra.mxu0 0.0
        %507 = vmatprep.subr.mxu0 0.0
        %508 = vmatpush1.msra.mxu0 0.0
        %509 = vmatprep.mubr.f32.mxu0 0.0
        %510 = vmatmul.mubr.f32.gmra.mrb[0].mxu0 %v398
        %v511 = vpop.f32.mrb[0].mxu0
        %v512 = vadd.f32 %v319, %v511
        %v513 = vpop.f32.mrb[0].mxu0
        %v514 = vadd.f32 %v319, %v513
        %515 = vmatprep.mubr.f32.mxu0 0.0
        %516 = vmatmul.mubr.f32.gmra.mrb[0].mxu0 %v401
        %v517 = vpop.f32.mrb[0].mxu0
        %v518 = vadd.f32 %v324, %v517
        %v519 = vpop.f32.mrb[0].mxu0
        %v520 = vadd.f32 %v324, %v519
        %521 = vmatprep.mubr.f32.mxu0 0.0
        %522 = vmatmul.mubr.f32.gmra.mrb[0].mxu0 %v404
        %v523 = vpop.f32.mrb[0].mxu0
        %v524 = vadd.f32 %v329, %v523
        %v525 = vpop.f32.mrb[0].mxu0
        %v526 = vadd.f32 %v329, %v525
        %527 = vmatprep.mubr.f32.mxu0 0.0
        %528 = vmatmul.mubr.f32.gmra.mrb[0].mxu0 %v407
        %v529 = vpop.f32.mrb[0].mxu0
        %v530 = vadd.f32 %v334, %v529
        %v531 = vpop.f32.mrb[0].mxu0
        %v532 = vadd.f32 %v334, %v531
        %533 = vmatprep.mubr.f32.mxu0 0.0
        %534 = vmatmul.mubr.f32.gmra.mrb[0].mxu0 %v410
        %v535 = vpop.f32.mrb[0].mxu0
        %v536 = vadd.f32 %v339, %v535
        %v537 = vpop.f32.mrb[0].mxu0
        %v538 = vadd.f32 %v339, %v537
        %539 = vmatprep.mubr.f32.mxu0 0.0
        %540 = vmatmul.mubr.f32.gmra.mrb[0].mxu0 %v413
        %v541 = vpop.f32.mrb[0].mxu0
        %v542 = vadd.f32 %v344, %v541
        %v543 = vpop.f32.mrb[0].mxu0
        %v544 = vadd.f32 %v344, %v543
        %545 = vmatprep.mubr.f32.mxu0 0.0
        %546 = vmatmul.mubr.f32.gmra.mrb[0].mxu0 %v416
        %v547 = vpop.f32.mrb[0].mxu0
        %v548 = vadd.f32 %v349, %v547
        %v549 = vpop.f32.mrb[0].mxu0
        %v550 = vadd.f32 %v349, %v549
        %551 = vmatprep.mubr.f32.mxu0 0.0
        %552 = vmatmul.mubr.f32.gmra.mrb[0].mxu0 %v419
        %v553 = vpop.f32.mrb[0].mxu0
        %v554 = vadd.f32 %v354, %v553
        %v555 = vpop.f32.mrb[0].mxu0
        %v556 = vadd.f32 %v354, %v555
        %557 = vmatprep.mubr.f32.mxu0 0.0
        %558 = vmatmul.mubr.f32.gmra.mrb[0].mxu0 %v422
        %v559 = vpop.f32.mrb[0].mxu0
        %v560 = vadd.f32 %v359, %v559
        %v561 = vpop.f32.mrb[0].mxu0
        %v562 = vadd.f32 %v359, %v561
        %563 = vmatprep.mubr.f32.mxu0 0.0
        %564 = vmatmul.mubr.f32.gmra.mrb[0].mxu0 %v425
        %v565 = vpop.f32.mrb[0].mxu0
        %v566 = vadd.f32 %v364, %v565
        %v567 = vpop.f32.mrb[0].mxu0
        %v568 = vadd.f32 %v364, %v567
        %569 = vmatprep.mubr.f32.mxu0 0.0
        %570 = vmatmul.mubr.f32.gmra.mrb[0].mxu0 %v428
        %v571 = vpop.f32.mrb[0].mxu0
        %v572 = vadd.f32 %v369, %v571
        %v573 = vpop.f32.mrb[0].mxu0
        %v574 = vadd.f32 %v369, %v573
        %575 = vmatprep.mubr.f32.mxu0 0.0
        %576 = vmatmul.mubr.f32.gmra.mrb[0].mxu0 %v431
        %v577 = vpop.f32.mrb[0].mxu0
        %v578 = vadd.f32 %v374, %v577
        %v579 = vpop.f32.mrb[0].mxu0
        %v580 = vadd.f32 %v374, %v579
        %581 = vmatprep.mubr.f32.mxu0 0.0
        %582 = vmatmul.mubr.f32.gmra.mrb[0].mxu0 %v434
        %v583 = vpop.f32.mrb[0].mxu0
        %v584 = vadd.f32 %v379, %v583
        %v585 = vpop.f32.mrb[0].mxu0
        %v586 = vadd.f32 %v379, %v585
        %587 = vmatprep.mubr.f32.mxu0 0.0
        %588 = vmatmul.mubr.f32.gmra.mrb[0].mxu0 %v437
        %v589 = vpop.f32.mrb[0].mxu0
        %v590 = vadd.f32 %v384, %v589
        %v591 = vpop.f32.mrb[0].mxu0
        %v592 = vadd.f32 %v384, %v591
        %593 = vmatprep.mubr.f32.mxu0 0.0
        %594 = vmatmul.mubr.f32.gmra.mrb[0].mxu0 %v440
        %v595 = vpop.f32.mrb[0].mxu0
        %v596 = vadd.f32 %v389, %v595
        %v597 = vpop.f32.mrb[0].mxu0
        %v598 = vadd.f32 %v389, %v597
        %599 = vmatprep.mubr.f32.mxu0 0.0
        %600 = vmatmul.mubr.f32.gmra.mrb[0].mxu0 %v443
        %v601 = vpop.f32.mrb[0].mxu0
        %v602 = vadd.f32 %v394, %v601
        %v603 = vpop.f32.mrb[0].mxu0
        %v604 = vadd.f32 %v394, %v603
        %605 = vdwg.mxu0
        %v606 = vmul.f32 %v512, 0.2
        %v607 = vmul.f32 %v514, 0.2
        %v608 = vmul.f32 %v518, 0.2
        %v609 = vmul.f32 %v520, 0.2
        %v610 = vmul.f32 %v524, 0.2
        %v611 = vmul.f32 %v526, 0.2
        %v612 = vmul.f32 %v530, 0.2
        %v613 = vmul.f32 %v532, 0.2
        %v614 = vmul.f32 %v536, 0.2
        %v615 = vmul.f32 %v538, 0.2
        %v616 = vmul.f32 %v542, 0.2
        %v617 = vmul.f32 %v544, 0.2
        %v618 = vmul.f32 %v548, 0.2
        %v619 = vmul.f32 %v550, 0.2
        %v620 = vmul.f32 %v554, 0.2
        %v621 = vmul.f32 %v556, 0.2
        %v622 = vmul.f32 %v560, 0.2
        %v623 = vmul.f32 %v562, 0.2
        %v624 = vmul.f32 %v566, 0.2
        %v625 = vmul.f32 %v568, 0.2
        %v626 = vmul.f32 %v572, 0.2
        %v627 = vmul.f32 %v574, 0.2
        %v628 = vmul.f32 %v578, 0.2
        %v629 = vmul.f32 %v580, 0.2
        %v630 = vmul.f32 %v584, 0.2
        %v631 = vmul.f32 %v586, 0.2
        %v632 = vmul.f32 %v590, 0.2
        %v633 = vmul.f32 %v592, 0.2
        %v634 = vmul.f32 %v596, 0.2
        %v635 = vmul.f32 %v598, 0.2
        %v636 = vmul.f32 %v602, 0.2
        %v637 = vmul.f32 %v604, 0.2
        %v638 = vmax.f32 %v512, %v606
        %v639 = vmax.f32 %v514, %v607
        %v640 = vmax.f32 %v518, %v608
        %v641 = vmax.f32 %v520, %v609
        %v642 = vmax.f32 %v524, %v610
        %v643 = vmax.f32 %v526, %v611
        %v644 = vmax.f32 %v530, %v612
        %v645 = vmax.f32 %v532, %v613
        %v646 = vmax.f32 %v536, %v614
        %v647 = vmax.f32 %v538, %v615
        %v648 = vmax.f32 %v542, %v616
        %v649 = vmax.f32 %v544, %v617
        %v650 = vmax.f32 %v548, %v618
        %v651 = vmax.f32 %v550, %v619
        %v652 = vmax.f32 %v554, %v620
        %v653 = vmax.f32 %v556, %v621
        %v654 = vmax.f32 %v560, %v622
        %v655 = vmax.f32 %v562, %v623
        %v656 = vmax.f32 %v566, %v624
        %v657 = vmax.f32 %v568, %v625
        %v658 = vmax.f32 %v572, %v626
        %v659 = vmax.f32 %v574, %v627
        %v660 = vmax.f32 %v578, %v628
        %v661 = vmax.f32 %v580, %v629
        %v662 = vmax.f32 %v584, %v630
        %v663 = vmax.f32 %v586, %v631
        %v664 = vmax.f32 %v590, %v632
        %v665 = vmax.f32 %v592, %v633
        %v666 = vmax.f32 %v596, %v634
        %v667 = vmax.f32 %v598, %v635
        %v668 = vmax.f32 %v602, %v636
        %v669 = vmax.f32 %v604, %v637
        %v670 = vld [vmem:[%s3] sm:$0xff]
        %v671 = vld [vmem:[%s3 + $0x8] sm:$0xff]
        %v672 = vld [vmem:[%s3 + $0x10] sm:$0xff]
        %v673 = vld [vmem:[%s3 + $0x18] sm:$0xff]
        %v674 = vld [vmem:[%s3 + $0x20] sm:$0xff]
        %v675 = vld [vmem:[%s3 + $0x28] sm:$0xff]
        %v676 = vld [vmem:[%s3 + $0x30] sm:$0xff]
        %v677 = vld [vmem:[%s3 + $0x38] sm:$0xff]
        %v678 = vld [vmem:[%s4] sm:$0xff]
        %v679 = vld [vmem:[%s4 + $0x8] sm:$0xff]
        %v680 = vld [vmem:[%s4 + $0x10] sm:$0xff]
        %v681 = vld [vmem:[%s4 + $0x18] sm:$0xff]
        %v682 = vld [vmem:[%s4 + $0x20] sm:$0xff]
        %v683 = vld [vmem:[%s4 + $0x28] sm:$0xff]
        %v684 = vld [vmem:[%s4 + $0x30] sm:$0xff]
        %v685 = vld [vmem:[%s4 + $0x38] sm:$0xff]
        %687 = vset.pattern.permute.xlu0 0
        %688 = vperm.xlu0 %687, %v678
        %v689 = vpop.permute.xlu0 %688
        %692 = vset.pattern.permute.xlu0 0
        %693 = vperm.xlu0 %692, %v679
        %v694 = vpop.permute.xlu0 %693
        %697 = vset.pattern.permute.xlu0 0
        %698 = vperm.xlu0 %697, %v680
        %v699 = vpop.permute.xlu0 %698
        %702 = vset.pattern.permute.xlu0 0
        %703 = vperm.xlu0 %702, %v681
        %v704 = vpop.permute.xlu0 %703
        %707 = vset.pattern.permute.xlu0 0
        %708 = vperm.xlu0 %707, %v682
        %v709 = vpop.permute.xlu0 %708
        %712 = vset.pattern.permute.xlu0 0
        %713 = vperm.xlu0 %712, %v683
        %v714 = vpop.permute.xlu0 %713
        %717 = vset.pattern.permute.xlu0 0
        %718 = vperm.xlu0 %717, %v684
        %v719 = vpop.permute.xlu0 %718
        %722 = vset.pattern.permute.xlu0 0
        %723 = vperm.xlu0 %722, %v685
        %v724 = vpop.permute.xlu0 %723
        %726 = vmatprep.subr.mxu0 %v639
        %727 = vmatpush1.msra.mxu0 %v638
        %728 = vmatprep.subr.mxu0 %v641
        %729 = vmatpush1.msra.mxu0 %v640
        %730 = vmatprep.subr.mxu0 %v643
        %731 = vmatpush1.msra.mxu0 %v642
        %732 = vmatprep.subr.mxu0 %v645
        %733 = vmatpush1.msra.mxu0 %v644
        %734 = vmatprep.subr.mxu0 %v647
        %735 = vmatpush1.msra.mxu0 %v646
        %736 = vmatprep.subr.mxu0 %v649
        %737 = vmatpush1.msra.mxu0 %v648
        %738 = vmatprep.subr.mxu0 %v651
        %739 = vmatpush1.msra.mxu0 %v650
        %740 = vmatprep.subr.mxu0 %v653
        %741 = vmatpush1.msra.mxu0 %v652
        %742 = vmatprep.subr.mxu0 %v655
        %743 = vmatpush1.msra.mxu0 %v654
        %744 = vmatprep.subr.mxu0 %v657
        %745 = vmatpush1.msra.mxu0 %v656
        %746 = vmatprep.subr.mxu0 %v659
        %747 = vmatpush1.msra.mxu0 %v658
        %748 = vmatprep.subr.mxu0 %v661
        %749 = vmatpush1.msra.mxu0 %v660
        %750 = vmatprep.subr.mxu0 %v663
        %751 = vmatpush1.msra.mxu0 %v662
        %752 = vmatprep.subr.mxu0 %v665
        %753 = vmatpush1.msra.mxu0 %v664
        %754 = vmatprep.subr.mxu0 %v667
        %755 = vmatpush1.msra.mxu0 %v666
        %756 = vmatprep.subr.mxu0 %v669
        %757 = vmatpush1.msra.mxu0 %v668
        %758 = vmatprep.subr.mxu0 0.0
        %759 = vmatpush1.msra.mxu0 0.0
        %760 = vmatprep.subr.mxu0 0.0
        %761 = vmatpush1.msra.mxu0 0.0
        %762 = vmatprep.subr.mxu0 0.0
        %763 = vmatpush1.msra.mxu0 0.0
        %764 = vmatprep.subr.mxu0 0.0
        %765 = vmatpush1.msra.mxu0 0.0
        %766 = vmatprep.subr.mxu0 0.0
        %767 = vmatpush1.msra.mxu0 0.0
        %768 = vmatprep.subr.mxu0 0.0
        %769 = vmatpush1.msra.mxu0 0.0
        %770 = vmatprep.subr.mxu0 0.0
        %771 = vmatpush1.msra.mxu0 0.0
        %772 = vmatprep.subr.mxu0 0.0
        %773 = vmatpush1.msra.mxu0 0.0
        %774 = vmatprep.subr.mxu0 0.0
        %775 = vmatpush1.msra.mxu0 0.0
        %776 = vmatprep.subr.mxu0 0.0
        %777 = vmatpush1.msra.mxu0 0.0
        %778 = vmatprep.subr.mxu0 0.0
        %779 = vmatpush1.msra.mxu0 0.0
        %780 = vmatprep.subr.mxu0 0.0
        %781 = vmatpush1.msra.mxu0 0.0
        %782 = vmatprep.subr.mxu0 0.0
        %783 = vmatpush1.msra.mxu0 0.0
        %784 = vmatprep.subr.mxu0 0.0
        %785 = vmatpush1.msra.mxu0 0.0
        %786 = vmatprep.subr.mxu0 0.0
        %787 = vmatpush1.msra.mxu0 0.0
        %788 = vmatprep.subr.mxu0 0.0
        %789 = vmatpush1.msra.mxu0 0.0
        %790 = vmatprep.mubr.f32.mxu0 0.0
        %791 = vmatmul.mubr.f32.gmra.mrb[0].mxu0 %v670
        %v792 = vpop.f32.mrb[0].mxu0
        %v793 = vadd.f32 %v689, %v792
        %v794 = vpop.f32.mrb[0].mxu0
        %v795 = vadd.f32 %v689, %v794
        %796 = vmatprep.mubr.f32.mxu0 0.0
        %797 = vmatmul.mubr.f32.gmra.mrb[0].mxu0 %v671
        %v798 = vpop.f32.mrb[0].mxu0
        %v799 = vadd.f32 %v694, %v798
        %v800 = vpop.f32.mrb[0].mxu0
        %v801 = vadd.f32 %v694, %v800
        %802 = vmatprep.mubr.f32.mxu0 0.0
        %803 = vmatmul.mubr.f32.gmra.mrb[0].mxu0 %v672
        %v804 = vpop.f32.mrb[0].mxu0
        %v805 = vadd.f32 %v699, %v804
        %v806 = vpop.f32.mrb[0].mxu0
        %v807 = vadd.f32 %v699, %v806
        %808 = vmatprep.mubr.f32.mxu0 0.0
        %809 = vmatmul.mubr.f32.gmra.mrb[0].mxu0 %v673
        %v810 = vpop.f32.mrb[0].mxu0
        %v811 = vadd.f32 %v704, %v810
        %v812 = vpop.f32.mrb[0].mxu0
        %v813 = vadd.f32 %v704, %v812
        %814 = vmatprep.mubr.f32.mxu0 0.0
        %815 = vmatmul.mubr.f32.gmra.mrb[0].mxu0 %v674
        %v816 = vpop.f32.mrb[0].mxu0
        %v817 = vadd.f32 %v709, %v816
        %v818 = vpop.f32.mrb[0].mxu0
        %v819 = vadd.f32 %v709, %v818
        %820 = vmatprep.mubr.f32.mxu0 0.0
        %821 = vmatmul.mubr.f32.gmra.mrb[0].mxu0 %v675
        %v822 = vpop.f32.mrb[0].mxu0
        %v823 = vadd.f32 %v714, %v822
        %v824 = vpop.f32.mrb[0].mxu0
        %v825 = vadd.f32 %v714, %v824
        %826 = vmatprep.mubr.f32.mxu0 0.0
        %827 = vmatmul.mubr.f32.gmra.mrb[0].mxu0 %v676
        %v828 = vpop.f32.mrb[0].mxu0
        %v829 = vadd.f32 %v719, %v828
        %v830 = vpop.f32.mrb[0].mxu0
        %v831 = vadd.f32 %v719, %v830
        %832 = vmatprep.mubr.f32.mxu0 0.0
        %833 = vmatmul.mubr.f32.gmra.mrb[0].mxu0 %v677
        %v834 = vpop.f32.mrb[0].mxu0
        %v835 = vadd.f32 %v724, %v834
        %v836 = vpop.f32.mrb[0].mxu0
        %v837 = vadd.f32 %v724, %v836
        %838 = vdwg.mxu0
        %v839 = vmul.f32 %v793, 0.2
        %v840 = vmul.f32 %v795, 0.2
        %v841 = vmul.f32 %v799, 0.2
        %v842 = vmul.f32 %v801, 0.2
        %v843 = vmul.f32 %v805, 0.2
        %v844 = vmul.f32 %v807, 0.2
        %v845 = vmul.f32 %v811, 0.2
        %v846 = vmul.f32 %v813, 0.2
        %v847 = vmul.f32 %v817, 0.2
        %v848 = vmul.f32 %v819, 0.2
        %v849 = vmul.f32 %v823, 0.2
        %v850 = vmul.f32 %v825, 0.2
        %v851 = vmul.f32 %v829, 0.2
        %v852 = vmul.f32 %v831, 0.2
        %v853 = vmul.f32 %v835, 0.2
        %v854 = vmul.f32 %v837, 0.2
        %v855 = vmax.f32 %v793, %v839
        %v856 = vmax.f32 %v795, %v840
        %v857 = vmax.f32 %v799, %v841
        %v858 = vmax.f32 %v801, %v842
        %v859 = vmax.f32 %v805, %v843
        %v860 = vmax.f32 %v807, %v844
        %v861 = vmax.f32 %v811, %v845
        %v862 = vmax.f32 %v813, %v846
        %v863 = vmax.f32 %v817, %v847
        %v864 = vmax.f32 %v819, %v848
        %v865 = vmax.f32 %v823, %v849
        %v866 = vmax.f32 %v825, %v850
        %v867 = vmax.f32 %v829, %v851
        %v868 = vmax.f32 %v831, %v852
        %v869 = vmax.f32 %v835, %v853
        %v870 = vmax.f32 %v837, %v854
        %v871 = vld [vmem:[%s5] sm:$0xff]
        %v872 = vld [vmem:[%s5 + $0x8] sm:$0xff]
        %v873 = vld [vmem:[%s5 + $0x10] sm:$0xff]
        %v874 = vld [vmem:[%s5 + $0x18] sm:$0xff]
        %v875 = vld [vmem:[%s5 + $0x20] sm:$0xff]
        %v876 = vld [vmem:[%s5 + $0x28] sm:$0xff]
        %v877 = vld [vmem:[%s5 + $0x30] sm:$0xff]
        %v878 = vld [vmem:[%s5 + $0x38] sm:$0xff]
        %880 = vset.pattern.permute.xlu0 0
        %881 = vperm.xlu0 %880, %v871
        %v882 = vpop.permute.xlu0 %881
        %885 = vset.pattern.permute.xlu0 0
        %886 = vperm.xlu0 %885, %v872
        %v887 = vpop.permute.xlu0 %886
        %890 = vset.pattern.permute.xlu0 0
        %891 = vperm.xlu0 %890, %v873
        %v892 = vpop.permute.xlu0 %891
        %895 = vset.pattern.permute.xlu0 0
        %896 = vperm.xlu0 %895, %v874
        %v897 = vpop.permute.xlu0 %896
        %900 = vset.pattern.permute.xlu0 0
        %901 = vperm.xlu0 %900, %v875
        %v902 = vpop.permute.xlu0 %901
        %905 = vset.pattern.permute.xlu0 0
        %906 = vperm.xlu0 %905, %v876
        %v907 = vpop.permute.xlu0 %906
        %910 = vset.pattern.permute.xlu0 0
        %911 = vperm.xlu0 %910, %v877
        %v912 = vpop.permute.xlu0 %911
        %915 = vset.pattern.permute.xlu0 0
        %916 = vperm.xlu0 %915, %v878
        %v917 = vpop.permute.xlu0 %916
        %v919 = vmul.f32 %v855, %v882
        %v920 = vmul.f32 %v856, %v882
        %v921 = vmul.f32 %v857, %v887
        %v922 = vmul.f32 %v858, %v887
        %v923 = vmul.f32 %v859, %v892
        %v924 = vmul.f32 %v860, %v892
        %v925 = vmul.f32 %v861, %v897
        %v926 = vmul.f32 %v862, %v897
        %v927 = vmul.f32 %v863, %v902
        %v928 = vmul.f32 %v864, %v902
        %v929 = vmul.f32 %v865, %v907
        %v930 = vmul.f32 %v866, %v907
        %v931 = vmul.f32 %v867, %v912
        %v932 = vmul.f32 %v868, %v912
        %v933 = vmul.f32 %v869, %v917
        %v934 = vmul.f32 %v870, %v917
        %v935 = vadd.f32 %v919, %v921
        %v936 = vadd.f32 %v935, %v923
        %v937 = vadd.f32 %v936, %v925
        %v938 = vadd.f32 %v937, %v927
        %v939 = vadd.f32 %v938, %v929
        %v940 = vadd.f32 %v939, %v931
        %v941 = vadd.f32 %v940, %v933
        %v942 = vrot.slane %v941, 4
        %v943 = vadd.f32 %v941, %v942
        %v944 = vrot.slane %v943, 2
        %v945 = vadd.f32 %v943, %v944
        %v946 = vrot.slane %v945, 1
        %v947 = vadd.f32 %v945, %v946
        %v948 = vadd.f32 %v920, %v922
        %v949 = vadd.f32 %v948, %v924
        %v950 = vadd.f32 %v949, %v926
        %v951 = vadd.f32 %v950, %v928
        %v952 = vadd.f32 %v951, %v930
        %v953 = vadd.f32 %v952, %v932
        %v954 = vadd.f32 %v953, %v934
        %v955 = vrot.slane %v954, 4
        %v956 = vadd.f32 %v954, %v955
        %v957 = vrot.slane %v956, 2
        %v958 = vadd.f32 %v956, %v957
        %v959 = vrot.slane %v958, 1
        %v960 = vadd.f32 %v958, %v959
        %v961 = vld [vmem:[#allocation2] sm:$0x1]
        %963 = vset.pattern.permute.xlu0 0
        %964 = vperm.xlu0 %963, %v961
        %v965 = vpop.permute.xlu0 %964
        %v967 = vlaneseq
        %v968 = vshrl.u32 %v967, 7
        %v969 = vsub.s32 0, %v968
        %v970 = vrot.slane %v965, %v969
        %v971 = vadd.f32 %v947, %v970
        %v972 = vadd.f32 %v960, %v970
        %v975 = vcombine.low %v971, %v972
        %v977 = vunpack.c.l.s4 1966171168
        %v978 = vunpack.c.0.s8 %v977
        %v979 = vlaneseq
        %v980 = vshrl.u32 %v979, 7
        %v981 = vsub.s32 %v978, %v980
        %v982 = vrot.slane %v975, %v981
        %v984 = vunpack.c.l.s4 1966171168
        %v985 = vunpack.c.0.s8 %v984
        %v986 = vlaneseq
        %v987 = vshrl.u32 %v986, 7
        %v988 = vsub.s32 %v985, %v987
        %v989 = vrot.slane %v982, %v988
        %v991 = vlaneseq
        %vm992 = vcmp.ge.s32.totalorder %v991, 0
        %vm993 = vcmp.lt.s32.totalorder %v991, 256
        %vm994 = vmand %vm992, %vm993
        %995 = vst.msk [vmem:[%s274] sm:$0x3] %vm994, %v989
        %s996 = sand.u32 %s183, 1
        %s997 = scalar_lea.sflag [#allocation4], %s996
        %s998 = sand.u32 %s183, 1
        %s999 = smul.addr %s998, 2
        %s1000 = scalar_lea.vmem [#allocation3], %s999
        // Predicated region
        $region49: #{tpu_custom_call.1} parent=47 // pred_check
          %p1001 = pneg %p193
        $region50: #{tpu_custom_call.1} parent=47 // pred_check_branch
          %1003 = sbr.rel (%p1001) target = $region52
        $region51: #{tpu_custom_call.1} parent=47 // pred_region
          %s1004 = smul.u32 2, %s23
          %s1006 = ssub.s32 32, 32
          %1007 = vsyncadd %s997, %s1006
          %s1008 = smul.addr %s1004, 16
          %s1009 = scalar_lea.hbm %s7, %s1008
          %s1011 = sshll.u32 %s1000, 4
          %s1012 = int_to_ptr.vmem [resolvable:$true] %s1011
          %1014 = dma.vmem_to_hbm [thread:$0]  %s1012, 32, %s1009, %s997
        $region52: #{tpu_custom_call.1} parent=47 // pred_fallthru
          _
      $region48: #{tpu_custom_call.1} parent=5 // pred_fallthru
        _
      %p1015 = scmp.le.s32.totalorder 2, %s18
      // Predicated region
      $region53: #{tpu_custom_call.1} parent=5 // pred_check
        %p1016 = pneg %p1015
      $region54: #{tpu_custom_call.1} parent=5 // pred_check_branch
        %1018 = sbr.rel (%p1016) target = $region56
      $region55: #{tpu_custom_call.1} parent=5 // pred_region
        %s1019 = ssub.s32 %s18, 2
        // Predicated region
        $region57: #{tpu_custom_call.1} parent=55 // pred_check
          %p1020 = pneg %p199
        $region58: #{tpu_custom_call.1} parent=55 // pred_check_branch
          %1022 = sbr.rel (%p1020) target = $region60
        $region59: #{tpu_custom_call.1} parent=55 // pred_region
          %s1023 = sand.u32 %s184, 1
          %s1024 = scalar_lea.sflag [#allocation4], %s1023
          %s1025 = sand.u32 %s184, 1
          %s1026 = smul.addr %s1025, 2
          %s1027 = scalar_lea.vmem [#allocation3], %s1026
          %1028 = dma.done %s1024, 32
        $region60: #{tpu_custom_call.1} parent=55 // pred_fallthru
          _
      $region56: #{tpu_custom_call.1} parent=5 // pred_fallthru
        _
    $region6: #{tpu_custom_call.1} parent=1 // loop_footer
      %s22 = sadd.s32 1, %s18
    $region7: #{tpu_custom_call.1} parent=1 // loop_footer_branch
      %17 = sbr.rel target = $region3
    $region8: #{tpu_custom_call.1} parent=1 // loop_exit
      _
    %1029 = vsyncpa [#allocation4], 1
    %s1030 = scalar_lea.sflag [#allocation4], 1
    %1031 = vsyncpa %s1030, 1

</llo_original>
